<compile_context>
chip_gen: v6e
topology: v6e:2x2x1
jax: 0.10.0
libtpu: 0.0.40
codegen_flags: <defaults>
</compile_context>

<pallas_src>
import jax
import jax.numpy as jnp
from jax.experimental import pallas as pl
from jax.experimental.pallas import tpu as pltpu


_MAX_DMA_CHUNKS = 8          # a handful of concurrent DMAs saturates HBM BW
_MIN_CHUNK_BYTES = 1 << 20   # don't bother splitting below ~1 MiB per chunk


def _chunk_bounds(leading, bytes_per_row):
    """Static (start, size) chunks along axis 0 for concurrent DMAs."""
    total = leading * bytes_per_row
    if leading <= 1 or total < 2 * _MIN_CHUNK_BYTES:
        return ((0, leading),)
    n_chunks = int(min(_MAX_DMA_CHUNKS, leading,
                       max(1, total // _MIN_CHUNK_BYTES)))
    base, rem = divmod(leading, n_chunks)
    bounds, start = [], 0
    for i in range(n_chunks):
        size = base + (1 if i < rem else 0)
        bounds.append((start, size))
        start += size
    return tuple(bounds)


def _make_dma_identity_kernel(chunk_bounds):
    """Kernel: the whole _Hax forward pass as direct HBM->HBM DMA copies."""

    def kernel(x_hbm, o_hbm, sem):
        copies = []
        for i, (start, size) in enumerate(chunk_bounds):
            cp = pltpu.make_async_copy(
                x_hbm.at[pl.ds(start, size)],
                o_hbm.at[pl.ds(start, size)],
                sem.at[i],
            )
            cp.start()
            copies.append(cp)
        for cp in copies:      # all chunks are in flight; now drain them
            cp.wait()

    return kernel


def _dma_identity_copy(x):
    """Identity-copy `x` (any shape/dtype) via direct HBM->HBM DMAs."""
    itemsize = jnp.dtype(x.dtype).itemsize
    bytes_per_row = (x.size // x.shape[0]) * itemsize
    bounds = _chunk_bounds(x.shape[0], bytes_per_row)
    nbytes = x.size * itemsize

    return pl.pallas_call(
        _make_dma_identity_kernel(bounds),
        out_shape=jax.ShapeDtypeStruct(x.shape, x.dtype),
        in_specs=[pl.BlockSpec(memory_space=pl.ANY)],   # raw HBM ref, no auto-DMA
        out_specs=pl.BlockSpec(memory_space=pl.ANY),    # raw HBM ref, written by DMA
        scratch_shapes=[pltpu.SemaphoreType.DMA((len(bounds),))],
        cost_estimate=pl.CostEstimate(
            flops=0, transcendentals=0, bytes_accessed=2 * nbytes),
    )(x)


@jax.jit
def hax_forward(x):
    """Identity forward pass of `_Hax`, run through a Pallas HBM->HBM DMA kernel."""
    if x.size == 0:
        return x                                       # nothing to copy
    if x.ndim == 0:
        return _dma_identity_copy(x.reshape(1)).reshape(())
    return _dma_identity_copy(x)


if __name__ == "__main__":
    key = jax.random.PRNGKey(0)
    # Small NCHW-style input consistent with typical usage of the module.
    x = jax.random.normal(key, (2, 4, 16, 16), dtype=jnp.float32)

    y = hax_forward(x)
    jax.block_until_ready(y)

    assert y.shape == x.shape
    assert y.dtype == x.dtype
    assert bool(jnp.array_equal(y, x)), "identity kernel mismatch"

    print("KERNEL_OK")
</pallas_src>

<mosaic_0001>
module attributes {stable_mosaic.version = 11 : i64} {
  func.func @kernel(%arg0: memref<2x4x16x16xf32, #tpu.memory_space<any>>, %arg1: memref<2x4x16x16xf32, #tpu.memory_space<any>>, %arg2: memref<1x!tpu.dma_semaphore, #tpu.memory_space<semaphore_mem>>) attributes {dimension_semantics = [], scalar_prefetch = 0 : i64, scratch_operands = 1 : i64, tpu.core_type = #tpu.core_type<tc>} {
    %c0_i32 = arith.constant 0 : i32
    %c0_i32_0 = arith.constant 0 : i32
    %c0_i32_1 = arith.constant 0 : i32
    %c0_i32_2 = arith.constant 0 : i32
    %c0_i32_3 = arith.constant 0 : i32
    %0 = tpu.memref_slice %arg0[%c0_i32_0, %c0_i32_1, %c0_i32_2, %c0_i32_3] : memref<2x4x16x16xf32, #tpu.memory_space<any>> -> memref<2x4x16x16xf32, #tpu.memory_space<any>>
    %c0_i32_4 = arith.constant 0 : i32
    %c0_i32_5 = arith.constant 0 : i32
    %c0_i32_6 = arith.constant 0 : i32
    %c0_i32_7 = arith.constant 0 : i32
    %1 = tpu.memref_slice %arg1[%c0_i32_4, %c0_i32_5, %c0_i32_6, %c0_i32_7] : memref<2x4x16x16xf32, #tpu.memory_space<any>> -> memref<2x4x16x16xf32, #tpu.memory_space<any>>
    %2 = tpu.memref_slice %arg2[%c0_i32] : memref<1x!tpu.dma_semaphore, #tpu.memory_space<semaphore_mem>> -> memref<1x!tpu.dma_semaphore, #tpu.memory_space<semaphore_mem>>
    %3 = tpu.memref_squeeze %2 : memref<1x!tpu.dma_semaphore, #tpu.memory_space<semaphore_mem>> -> memref<!tpu.dma_semaphore, #tpu.memory_space<semaphore_mem>>
    tpu.enqueue_dma source(%0 : memref<2x4x16x16xf32, #tpu.memory_space<any>>) target(%1 : memref<2x4x16x16xf32, #tpu.memory_space<any>>) target_semaphore(%3 : memref<!tpu.dma_semaphore, #tpu.memory_space<semaphore_mem>>)
    %c0_i32_8 = arith.constant 0 : i32
    %c0_i32_9 = arith.constant 0 : i32
    %c0_i32_10 = arith.constant 0 : i32
    %c0_i32_11 = arith.constant 0 : i32
    %c0_i32_12 = arith.constant 0 : i32
    %4 = tpu.memref_slice %arg0[%c0_i32_9, %c0_i32_10, %c0_i32_11, %c0_i32_12] : memref<2x4x16x16xf32, #tpu.memory_space<any>> -> memref<2x4x16x16xf32, #tpu.memory_space<any>>
    %c0_i32_13 = arith.constant 0 : i32
    %c0_i32_14 = arith.constant 0 : i32
    %c0_i32_15 = arith.constant 0 : i32
    %c0_i32_16 = arith.constant 0 : i32
    %5 = tpu.memref_slice %arg1[%c0_i32_13, %c0_i32_14, %c0_i32_15, %c0_i32_16] : memref<2x4x16x16xf32, #tpu.memory_space<any>> -> memref<2x4x16x16xf32, #tpu.memory_space<any>>
    %6 = tpu.memref_slice %arg2[%c0_i32_8] : memref<1x!tpu.dma_semaphore, #tpu.memory_space<semaphore_mem>> -> memref<1x!tpu.dma_semaphore, #tpu.memory_space<semaphore_mem>>
    %7 = tpu.memref_squeeze %6 : memref<1x!tpu.dma_semaphore, #tpu.memory_space<semaphore_mem>> -> memref<!tpu.dma_semaphore, #tpu.memory_space<semaphore_mem>>
    tpu.wait_dma2 semaphore(%7 : memref<!tpu.dma_semaphore, #tpu.memory_space<semaphore_mem>>) src(%4 : memref<2x4x16x16xf32, #tpu.memory_space<any>>) dst(%5 : memref<2x4x16x16xf32, #tpu.memory_space<any>>)
    return
  }
}

</mosaic_0001>

<llo_original>
// kernel: hax_forward.1
$region0: #{hax_forward.1}
  #allocation0 [shape = 'u32[]', space=smem, size = 0x4, offset = 0x4, fixed_abs, tag = 'smem constant byte address 0x4 - core index']
  #allocation1 [shape = 'u32[144,128]{1,0:T(1,128)}', space=vmem, size = 0x12000, scoped, tag = 'internal scratch']
  #allocation2 [shape = 's32[1]{0}', space=sflag, size = 0x4, scoped, tag = 'scratch operand']
  #allocation3 [shape = 's32[]', space=sflag, size = 0x4, offset = 0, fixed_abs, tag = 'sflag constant byte address 0x0 - dummy sync flag']
  #allocation4 [shape = 'u32[0]{0}', space=smem, size = 0, offset = 0, fixed_abs, tag = 'smem constant byte address 0x0 - null']
  %s0 = inlined_call_operand.hbm [shape: f32[2,4,16,16], index: 0, kind: input, shape index: {}]
  %s1 = inlined_call_operand.hbm [shape: f32[2,4,16,16], index: 1, kind: output, shape index: {}]
  %s2 = sld [smem:[#allocation0]]
  $region2: #{hax_forward.1} parent=0
    _
  %s4 = ssub.s32 1, %s2
  %s5 = scalar_select 0, %s4, %s2
  %s7 = sshll.u32 1, 14
  %s8 = sxor.u32 4294967295, %s7
  %12 = dma.general %s0, 2048, %s1, [#allocation2], 131072, [#allocation4], 0, 0
  %s13 = smul.u32 2, 4
  %s14 = smul.u32 %s13, 16
  %s15 = smul.u32 %s14, 1
  %s16 = sshll.u32 %s15, 4
  %17 = dma.done [#allocation2], %s16
  %18 = vsyncmov [#allocation2]
  %s19 = vpop.sfrf %18
  %p20 = scmp.eq.s32.totalorder %s19, 0
  %p21 = pneg %p20
  %23 = shalt.err (%p21)

</llo_original>
